<compile_context>
chip_gen: v7x
topology: tpu7x:2x2x1
jax: 0.10.0
libtpu: 0.0.40
codegen_flags: <defaults>
</compile_context>

<pallas_src>
import functools

import jax
import jax.numpy as jnp
from jax import lax
from jax.experimental import pallas as pl
from jax.experimental.pallas import tpu as pltpu


# ---------------------------------------------------------------------------
# generation-aware VMEM budgeting
# ---------------------------------------------------------------------------
def _tpu_vmem_capacity_bytes():
    try:
        info = pltpu.get_tpu_info()
        cap = getattr(info, "vmem_capacity_bytes", None)
        if cap:
            return int(cap)
    except Exception:
        pass
    return 64 * 1024 * 1024          # conservative default (v7x per-core VMEM)


def _vmem_limit_bytes():
    # Scoped-VMEM limit handed to Mosaic: half of physical, capped at 64 MiB.
    # v7x (64 MiB phys) -> 32 MiB; v5e/v6e (128 MiB phys) -> 64 MiB.
    return int(min(_tpu_vmem_capacity_bytes() // 2, 64 * 1024 * 1024))


def _tile_budget_bytes():
    # Share of the scoped limit our double-buffered pipeline tiles may occupy.
    return _vmem_limit_bytes() // 2


# ---------------------------------------------------------------------------
# tile-size helpers
# ---------------------------------------------------------------------------
def _choose_event_tile(num_events, bytes_per_row, budget_bytes, cap=1024):
    """Largest multiple-of-8 event tile whose double-buffered slabs fit the
    budget, capped at `cap` rows (diminishing returns past ~85% of roofline)."""
    if num_events <= 8:
        return num_events            # full dim -> always a legal block
    te = budget_bytes // max(1, 2 * bytes_per_row)
    te = min(cap, te, num_events)
    te = max(8, (te // 8) * 8)
    return te


def _choose_mlp_tile(in_f, hidden, budget_bytes):
    """Lane-tile T for the fused MLP.  Double-buffered live bytes per lane:
    W1 (hidden,T) + W2T (hidden,T) + x (1,T) + b2 (1,T) + out (1,T), each x2."""
    per_lane = 2 * (2 * hidden + 3) * 4
    t = budget_bytes // max(1, per_lane)
    t = min(t, 32768)                          # per-step DMA already >> overhead
    t = max(128, (t // 128) * 128)
    t = min(t, ((in_f + 127) // 128) * 128)    # no wider than padded in_f
    return t


def _pick_col_block(out_w, cw, nw, c_begin, n_begin, cap=2048):
    """Largest multiple-of-128 column block bw so that equal_scale's column
    selection is expressible purely in the BlockSpec index_map:
    bw | cw, bw | nw, c_begin % bw == 0, n_begin % bw == 0.  None -> fallback."""
    start = min(cap, out_w)
    start -= start % 128
    for bw in range(start, 0, -128):
        if cw % bw == 0 and nw % bw == 0 and c_begin % bw == 0 and n_begin % bw == 0:
            return bw
    return None


# ---------------------------------------------------------------------------
# fusion_type == 'equal_scale'
# ---------------------------------------------------------------------------
def _equal_scale_windowed_kernel(mask_ref, scale_ref, out_ref):
    # Column selection already done by the BlockSpec: lane-dense load/store.
    out_ref[...] = mask_ref[...] * scale_ref[...]


def _equal_scale_select_kernel(mask_ref, scale_ref, out_ref, *, c_begin, c_end,
                               n_begin, n_end):
    # Fallback for unaligned windows: full-width load, in-register select,
    # single lane-dense store.
    if c_end == n_begin:
        x = mask_ref[:, c_begin:n_end]
    else:
        x = jnp.concatenate(
            [mask_ref[:, c_begin:c_end], mask_ref[:, n_begin:n_end]], axis=1)
    out_ref[...] = x * scale_ref[...]


def equal_scale_fusion(mask, categorical_factor, numerical_factor,
                       c_begin, c_end, n_begin, n_end):
    E, F = mask.shape
    cw = c_end - c_begin
    nw = n_end - n_begin
    out_w = cw + nw

    # Per-lane scale vector built once wrapper-side (folds both scalar factors).
    scale = jnp.concatenate(
        [jnp.broadcast_to(jnp.asarray(categorical_factor).reshape(()), (cw,)),
         jnp.broadcast_to(jnp.asarray(numerical_factor).reshape(()), (nw,))]
    ).astype(mask.dtype).reshape(1, out_w)

    vmem_limit = _vmem_limit_bytes()
    budget = _tile_budget_bytes()
    bw = _pick_col_block(out_w, cw, nw, c_begin, n_begin)

    if bw is not None:
        # ---- windowed fast path: only selected columns are DMA'd -----------
        te = _choose_event_tile(E, 2 * bw * 4, budget)
        nc_blocks = cw // bw
        off_c = c_begin // bw
        off_n = n_begin // bw

        def mask_map(i, j):
            return (i, jnp.where(j < nc_blocks, off_c + j,
                                 off_n + (j - nc_blocks)))

        return pl.pallas_call(
            _equal_scale_windowed_kernel,
            out_shape=jax.ShapeDtypeStruct((E, out_w), mask.dtype),
            grid=(pl.cdiv(E, te), out_w // bw),
            in_specs=[
                pl.BlockSpec((te, bw), mask_map),
                pl.BlockSpec((1, bw), lambda i, j: (0, j)),
            ],
            out_specs=pl.BlockSpec((te, bw), lambda i, j: (i, j)),
            compiler_params=pltpu.CompilerParams(
                dimension_semantics=("parallel", "parallel"),
                vmem_limit_bytes=vmem_limit),
        )(mask, scale)

    # ---- fallback: full-width tile + in-register select ---------------------
    te = _choose_event_tile(E, (F + out_w) * 4, budget)
    kern = functools.partial(_equal_scale_select_kernel, c_begin=c_begin,
                             c_end=c_end, n_begin=n_begin, n_end=n_end)
    return pl.pallas_call(
        kern,
        out_shape=jax.ShapeDtypeStruct((E, out_w), mask.dtype),
        grid=(pl.cdiv(E, te),),
        in_specs=[
            pl.BlockSpec((te, F), lambda i: (i, 0)),
            pl.BlockSpec((1, out_w), lambda i: (0, 0)),
        ],
        out_specs=pl.BlockSpec((te, out_w), lambda i: (i, 0)),
        compiler_params=pltpu.CompilerParams(
            dimension_semantics=("parallel",),
            vmem_limit_bytes=vmem_limit),
    )(mask, scale)


# ---------------------------------------------------------------------------
# fusion_type == 'unequal_scale'
# ---------------------------------------------------------------------------
def _unequal_scale_kernel(mask_ref, w_ref, b_ref, out_ref):
    out_ref[...] = mask_ref[...] * w_ref[...] + b_ref[...]


def unequal_scale_fusion(mask, W, b):
    E, F = mask.shape
    te = _choose_event_tile(E, 4 * F * 4, _tile_budget_bytes())  # mask,W,b,out
    return pl.pallas_call(
        _unequal_scale_kernel,
        out_shape=jax.ShapeDtypeStruct(mask.shape, mask.dtype),
        grid=(pl.cdiv(E, te),),
        in_specs=[pl.BlockSpec((te, F), lambda i: (i, 0))] * 3,
        out_specs=pl.BlockSpec((te, F), lambda i: (i, 0)),
        compiler_params=pltpu.CompilerParams(
            dimension_semantics=("parallel",),
            vmem_limit_bytes=_vmem_limit_bytes()),
    )(mask, W, b)


# ---------------------------------------------------------------------------
# fusion_type == 'mlp'  —  fc1 + fc2 fused in one pallas_call
#   phase 1 (steps 0..nt-1)   : h += x_tile @ W1_tile.T            (K reduction)
#   phase 2 (steps nt..2nt-1) : out_tile = h @ W2T_tile + b2_tile  (N tiles)
# h (1, hidden) stays in a VMEM scratch for the whole grid; index_maps clamp
# each operand to its last-used block during the other phase so no redundant
# weight DMA is issued.
# ---------------------------------------------------------------------------
def _mlp_fused_kernel(x_ref, w1_ref, b1_ref, w2t_ref, b2_ref, out_ref, h_ref,
                      *, nt):
    t = pl.program_id(0)

    @pl.when(t == 0)
    def _():
        h_ref[...] = jnp.zeros_like(h_ref)

    @pl.when(t < nt)
    def _():
        # fc1: contract the shared in_f tile of x and W1 (native (out,in) layout)
        h_ref[...] += lax.dot_general(
            x_ref[...], w1_ref[...],
            dimension_numbers=(((1,), (1,)), ((), ())),
            preferred_element_type=jnp.float32)

    @pl.when(t == nt - 1)
    def _():
        h_ref[...] = h_ref[...] + b1_ref[...]

    @pl.when(t >= nt)
    def _():
        # fc2: lane-dense (hidden, T) weight tile, native (K, N) MXU feed
        y = lax.dot_general(
            h_ref[...], w2t_ref[...],
            dimension_numbers=(((1,), (0,)), ((), ())),
            preferred_element_type=jnp.float32) + b2_ref[...]
        out_ref[...] = y.astype(out_ref.dtype)


def make_mlp_fusion(fc1_w, fc1_b, fc2_w, fc2_b, num_events, num_features):
    """One-time parameter preparation (do this at module init, NOT per call):
    pads the in_f axis to a tile multiple and caches fc2_w pre-transposed to
    (hidden, in_f).  Returns a callable mask -> (num_events, num_features)."""
    hidden, in_f = fc1_w.shape
    assert in_f == num_events * num_features

    T = _choose_mlp_tile(in_f, hidden, _tile_budget_bytes())
    nt = pl.cdiv(in_f, T)
    in_f_pad = nt * T
    pad = in_f_pad - in_f

    # cached, possibly-padded parameters (one HBM pass, ever)
    w1 = jnp.pad(fc1_w, ((0, 0), (0, pad))) if pad else fc1_w
    w2t = jnp.asarray(fc2_w.T)                       # (hidden, in_f), lane-dense
    w2t = jnp.pad(w2t, ((0, 0), (0, pad))) if pad else w2t
    b1 = fc1_b.reshape(1, hidden).astype(jnp.float32)
    b2 = fc2_b.reshape(1, in_f)
    b2 = jnp.pad(b2, ((0, 0), (0, pad))) if pad else b2

    kern = functools.partial(_mlp_fused_kernel, nt=nt)
    call = pl.pallas_call(
        kern,
        out_shape=jax.ShapeDtypeStruct((1, in_f_pad), jnp.float32),
        grid=(2 * nt,),
        in_specs=[
            pl.BlockSpec((1, T), lambda t: (0, jnp.minimum(t, nt - 1))),       # x
            pl.BlockSpec((hidden, T), lambda t: (0, jnp.minimum(t, nt - 1))),  # W1
            pl.BlockSpec((1, hidden), lambda t: (0, 0)),                       # b1
            pl.BlockSpec((hidden, T), lambda t: (0, jnp.maximum(t - nt, 0))),  # W2T
            pl.BlockSpec((1, T), lambda t: (0, jnp.maximum(t - nt, 0))),       # b2
        ],
        out_specs=pl.BlockSpec((1, T), lambda t: (0, jnp.maximum(t - nt, 0))),
        scratch_shapes=[pltpu.VMEM((1, hidden), jnp.float32)],
        compiler_params=pltpu.CompilerParams(
            dimension_semantics=("arbitrary",),
            vmem_limit_bytes=_vmem_limit_bytes()),
    )

    def fused(mask):
        x = mask.reshape(1, in_f).astype(jnp.float32)
        if pad:
            x = jnp.pad(x, ((0, 0), (0, pad)))
        out = call(x, w1, b1, w2t, b2)
        if pad:
            out = out[:, :in_f]
        return out.astype(mask.dtype).reshape(num_events, num_features)

    return fused


# ---------------------------------------------------------------------------
# main
# ---------------------------------------------------------------------------
if __name__ == "__main__":
    # Module configuration (small, deterministic)
    num_events = 8
    num_features = 128
    hidden_dim = 32
    c_begin, c_end = 0, 64
    n_begin, n_end = 64, 128

    key = jax.random.PRNGKey(0)
    (k_mask, k_cf, k_nf, k_W, k_b, k_w1, k_b1, k_w2, k_b2,
     k_mask2) = jax.random.split(key, 10)

    # Input mask (num_events, num_features)
    mask = jax.random.normal(k_mask, (num_events, num_features), dtype=jnp.float32)

    # --- equal_scale parameters: N(1.0, 0.01) scalars ------------------------
    categorical_factor = 1.0 + 0.01 * jax.random.normal(k_cf, (1,), dtype=jnp.float32)
    numerical_factor = 1.0 + 0.01 * jax.random.normal(k_nf, (1,), dtype=jnp.float32)

    # --- unequal_scale parameters: W ~ N(1, .01), b ~ N(0, .01) ---------------
    W = 1.0 + 0.01 * jax.random.normal(k_W, (num_events, num_features), jnp.float32)
    b = 0.01 * jax.random.normal(k_b, (num_events, num_features), jnp.float32)

    # --- mlp parameters (PyTorch nn.Linear layout: (out_features, in)) --------
    in_f = num_events * num_features
    fc1_w = 0.01 * jax.random.normal(k_w1, (hidden_dim, in_f), jnp.float32)
    fc1_b = 0.01 * jax.random.normal(k_b1, (hidden_dim,), jnp.float32)
    fc2_w = 0.01 * jax.random.normal(k_w2, (in_f, hidden_dim), jnp.float32)
    fc2_b = 0.01 * jax.random.normal(k_b2, (in_f,), jnp.float32)

    # --- run the three Pallas paths -------------------------------------------
    out_eq = equal_scale_fusion(mask, categorical_factor, numerical_factor,
                                c_begin, c_end, n_begin, n_end)
    out_uneq = unequal_scale_fusion(mask, W, b)
    mlp_fn = make_mlp_fusion(fc1_w, fc1_b, fc2_w, fc2_b, num_events, num_features)
    out_mlp = mlp_fn(mask)

    # second equal_scale config exercising the 128-aligned windowed fast path
    E2, F2 = 16, 512
    c2_begin, c2_end, n2_begin, n2_end = 0, 128, 256, 384
    mask2 = jax.random.normal(k_mask2, (E2, F2), dtype=jnp.float32)
    out_eq2 = equal_scale_fusion(mask2, categorical_factor, numerical_factor,
                                 c2_begin, c2_end, n2_begin, n2_end)

    jax.block_until_ready((out_eq, out_uneq, out_mlp, out_eq2))

    # --- pure-JAX references (semantics of the PyTorch forward) ---------------
    ref_eq = jnp.concatenate(
        [mask[:, c_begin:c_end] * categorical_factor,
         mask[:, n_begin:n_end] * numerical_factor], axis=1)
    ref_eq2 = jnp.concatenate(
        [mask2[:, c2_begin:c2_end] * categorical_factor,
         mask2[:, n2_begin:n2_end] * numerical_factor], axis=1)
    ref_uneq = mask * W + b
    ref_hidden = mask.reshape(1, -1) @ fc1_w.T + fc1_b
    ref_mlp = (ref_hidden @ fc2_w.T + fc2_b).reshape(num_events, num_features)

    assert jnp.allclose(out_eq, ref_eq, atol=1e-5, rtol=1e-5)
    assert jnp.allclose(out_eq2, ref_eq2, atol=1e-5, rtol=1e-5)
    assert jnp.allclose(out_uneq, ref_uneq, atol=1e-5, rtol=1e-5)
    assert jnp.allclose(out_mlp, ref_mlp, atol=1e-5, rtol=1e-5)

    print("KERNEL_OK")
</pallas_src>

<mosaic_0001>
module attributes {stable_mosaic.version = 11 : i64} {
  func.func @_equal_scale_select_kernel(%arg0: i32, %arg1: memref<8x128xf32, #tpu.memory_space<vmem>>, %arg2: memref<1x128xf32, #tpu.memory_space<vmem>>, %arg3: memref<8x128xf32, #tpu.memory_space<vmem>>) attributes {dimension_semantics = [#tpu.dimension_semantics<parallel>], iteration_bounds = array<i64: 1>, scalar_prefetch = 0 : i64, scratch_operands = 0 : i64, tpu.core_type = #tpu.core_type<tc>, window_params = [{transform_indices = @transform_0, window_bounds = array<i64: 8, 128>}, {pipeline_mode = #tpu.pipeline_mode<synchronous>, transform_indices = @transform_1, window_bounds = array<i64: 1, 128>}, {transform_indices = @transform_2, window_bounds = array<i64: 8, 128>}]} {
    %c0 = arith.constant 0 : index
    %c0_0 = arith.constant 0 : index
    %0 = vector.load %arg1[%c0, %c0_0] : memref<8x128xf32, #tpu.memory_space<vmem>>, vector<8x128xf32>
    %c0_1 = arith.constant 0 : index
    %c0_2 = arith.constant 0 : index
    %1 = vector.load %arg2[%c0_1, %c0_2] : memref<1x128xf32, #tpu.memory_space<vmem>>, vector<1x128xf32>
    %2 = vector.broadcast %1 : vector<1x128xf32> to vector<8x128xf32>
    %3 = arith.mulf %0, %2 : vector<8x128xf32>
    %c0_3 = arith.constant 0 : index
    %c0_4 = arith.constant 0 : index
    %4 = vector.load %arg3[%c0_3, %c0_4] : memref<8x128xf32, #tpu.memory_space<vmem>>, vector<8x128xf32>
    tpu.vector_store %arg3[%c0_3, %c0_4], %3 {strides = array<i32>} : memref<8x128xf32, #tpu.memory_space<vmem>>, vector<8x128xf32>,
    return
  }
  func.func @transform_0(%arg0: i32) -> (i32, i32) {
    %c0_i32 = arith.constant 0 : i32
    %c0_i32_0 = arith.constant 0 : i32
    return %arg0, %c0_i32 : i32, i32
  }
  func.func @transform_1(%arg0: i32) -> (i32, i32) {
    %c0_i32 = arith.constant 0 : i32
    %c0_i32_0 = arith.constant 0 : i32
    %c0_i32_1 = arith.constant 0 : i32
    return %c0_i32, %c0_i32_0 : i32, i32
  }
  func.func @transform_2(%arg0: i32) -> (i32, i32) {
    %c0_i32 = arith.constant 0 : i32
    %c0_i32_0 = arith.constant 0 : i32
    return %arg0, %c0_i32 : i32, i32
  }
}

</mosaic_0001>

<llo_original>
// kernel: tpu_custom_call.1
$region0: #{tpu_custom_call.1}
  #allocation0 [shape = 'u32[]', space=smem, size = 0x4, offset = 0x4, fixed_abs, tag = 'smem constant byte address 0x4 - core index']
  #allocation1 [shape = 'u32[144,128]{1,0:T(1,128)}', space=vmem, size = 0x12000, scoped, tag = 'internal scratch']
  %s0 = inlined_call_operand.hbm [shape: f32[8,128], index: 0, kind: input, shape index: {}]
  %s1 = inlined_call_operand.vmem [shape: f32[1,128], index: 1, kind: input, shape index: {}]
  %s2 = inlined_call_operand.hbm [shape: f32[8,128], index: 2, kind: output, shape index: {}]
  %s3 = sld [smem:[#allocation0]]
  $region22: #{tpu_custom_call.1} parent=0
    _
  %s5 = ssub.s32 1, %s3
  %s6 = scalar_select 0, %s5, %s3
  $region1: #{tpu_custom_call.1} parent=0
    #allocation2 [shape = 'u8[4096]{0}', space=vmem, size = 0x1000, scoped, tag = 'input window, operand 0, single buffered']
    #allocation3 [shape = 's32[1]{0}', space=sflag, size = 0x4, scoped, tag = 'scoped memory for tpu_custom_call.1']
    #allocation4 [shape = 's32[1]{0}', space=sflag, size = 0x4, scoped, tag = 'scoped memory for tpu_custom_call.1']
    #allocation5 [shape = 'u8[4096]{0}', space=vmem, size = 0x1000, scoped, tag = 'output window, operand 0, single buffered']
    %7 = vsyncpa [#allocation3], 0
    %8 = vsyncpa [#allocation4], 0
    // Predicated region
    $region2: #{tpu_custom_call.1} parent=1 // pred_check
      _
    $region3: #{tpu_custom_call.1} parent=1 // pred_check_branch
      %10 = sbr.rel (0) target = $region5
    $region4: #{tpu_custom_call.1} parent=1 // pred_region
      %s12 = ssub.s32 128, 128
      %13 = vsyncadd [#allocation3], %s12
      %s15 = sshll.u32 [#allocation2], 4
      %s16 = int_to_ptr.vmem [resolvable:$true] %s15
      %18 = dma.hbm_to_vmem [thread:$0]  %s0, 128, %s16, [#allocation3]
    $region5: #{tpu_custom_call.1} parent=1 // pred_fallthru
      _
    // Predicated region
    $region6: #{tpu_custom_call.1} parent=1 // pred_check
      _
    $region7: #{tpu_custom_call.1} parent=1 // pred_check_branch
      %20 = sbr.rel (0) target = $region9
    $region8: #{tpu_custom_call.1} parent=1 // pred_region
      _
    $region9: #{tpu_custom_call.1} parent=1 // pred_fallthru
      _
    // Predicated region
    $region10: #{tpu_custom_call.1} parent=1 // pred_check
      _
    $region11: #{tpu_custom_call.1} parent=1 // pred_check_branch
      %22 = sbr.rel (0) target = $region13
    $region12: #{tpu_custom_call.1} parent=1 // pred_region
      %23 = dma.done [#allocation3], 128
    $region13: #{tpu_custom_call.1} parent=1 // pred_fallthru
      _
    %v24 = vld [vmem:[#allocation2] sm:$0xff]
    %v25 = vld [vmem:[%s1] sm:$0x1]
    %v27 = vlaneseq
    %v28 = vshrl.u32 %v27, 7
    %v29 = vsub.s32 0, %v28
    %v30 = vrot.slane %v25, %v29
    %v32 = vmul.f32 %v24, %v30
    %33 = vst [vmem:[#allocation5] sm:$0xff] %v32
    // Predicated region
    $region14: #{tpu_custom_call.1} parent=1 // pred_check
      _
    $region15: #{tpu_custom_call.1} parent=1 // pred_check_branch
      %35 = sbr.rel (0) target = $region17
    $region16: #{tpu_custom_call.1} parent=1 // pred_region
      %s37 = ssub.s32 128, 128
      %38 = vsyncadd [#allocation4], %s37
      %s40 = sshll.u32 [#allocation5], 4
      %s41 = int_to_ptr.vmem [resolvable:$true] %s40
      %43 = dma.vmem_to_hbm [thread:$0]  %s41, 128, %s2, [#allocation4]
    $region17: #{tpu_custom_call.1} parent=1 // pred_fallthru
      _
    // Predicated region
    $region18: #{tpu_custom_call.1} parent=1 // pred_check
      _
    $region19: #{tpu_custom_call.1} parent=1 // pred_check_branch
      %45 = sbr.rel (0) target = $region21
    $region20: #{tpu_custom_call.1} parent=1 // pred_region
      %46 = dma.done [#allocation4], 128
    $region21: #{tpu_custom_call.1} parent=1 // pred_fallthru
      _
    %47 = vsyncpa [#allocation3], 1
    %48 = vsyncpa [#allocation4], 1

</llo_original>
